<compile_context>
chip_gen: v7x
topology: tpu7x:2x2x1
jax: 0.10.0
libtpu: 0.0.40
codegen_flags: <defaults>
</compile_context>

<pallas_src>
import jax
import jax.numpy as jnp
from jax.experimental import pallas as pl
from jax.experimental.pallas import tpu as pltpu


def _round_up(x, m):
    return (x + m - 1) // m * m


# ---------------------------------------------------------------------------
# Kernels
# ---------------------------------------------------------------------------

def _mlp_kernel_resident(x_ref, w1_ref, b1_ref, w2_ref, b2_ref, o_ref):
    # Matmul 1 (bf16 operands, f32 accumulation), bias+ReLU in f32, cast straight to
    # bf16 so the f32 hidden tile's live range ends before y is produced.
    h16 = jnp.maximum(
        jnp.dot(x_ref[...], w1_ref[...], preferred_element_type=jnp.float32) + b1_ref[...],
        0.0,
    ).astype(jnp.bfloat16)
    y = jnp.dot(h16, w2_ref[...], preferred_element_type=jnp.float32) + b2_ref[...]
    # F.normalize(p=2, dim=1, eps=1e-12): y / max(||y||, eps) == y * rsqrt(max(ssq, eps^2)).
    ssq = jnp.sum(y * y, axis=1, keepdims=True)
    o_ref[...] = (y * jax.lax.rsqrt(jnp.maximum(ssq, 1e-24))).astype(o_ref.dtype)


def _mlp_kernel_ktiled(x_ref, w1_ref, b1_ref, w2_ref, b2_ref, o_ref, acc_ref):
    # Hidden-dim tiled variant: grid = (batch tiles, hidden tiles). ReLU is elementwise
    # over the hidden dim, so per-k-tile relu(x @ W1[:,k] + b1[k]) @ W2[k,:] accumulated
    # in f32 is exact (up to f32 summation order).
    k = pl.program_id(1)

    @pl.when(k == 0)
    def _():
        acc_ref[...] = jnp.zeros_like(acc_ref)

    h16 = jnp.maximum(
        jnp.dot(x_ref[...], w1_ref[...], preferred_element_type=jnp.float32) + b1_ref[...],
        0.0,
    ).astype(jnp.bfloat16)
    acc_ref[...] += jnp.dot(h16, w2_ref[...], preferred_element_type=jnp.float32)

    @pl.when(k == pl.num_programs(1) - 1)
    def _():
        y = acc_ref[...] + b2_ref[...]
        ssq = jnp.sum(y * y, axis=1, keepdims=True)
        o_ref[...] = (y * jax.lax.rsqrt(jnp.maximum(ssq, 1e-24))).astype(o_ref.dtype)


# ---------------------------------------------------------------------------
# VMEM budgeting / tile selection
# ---------------------------------------------------------------------------

def _tpu_caps():
    """(vmem_capacity_bytes, tensorcores_per_chip) with safe fallbacks."""
    vmem_cap = 64 << 20     # conservative default (v7x per-TC VMEM)
    num_cores = 1
    try:
        info = pltpu.get_tpu_info()
        vmem_cap = int(getattr(info, "vmem_capacity_bytes", vmem_cap))
        num_cores = int(getattr(info, "num_cores", getattr(info, "tensorcore_count", num_cores)))
    except Exception:
        pass
    try:
        num_cores = max(num_cores, int(getattr(jax.devices()[0], "num_cores", 1)))
    except Exception:
        pass
    return vmem_cap, max(1, min(2, num_cores))


def _resident_vmem_bytes(bm, nin_p, nh_p, out_bpe):
    return (
        2 * bm * nin_p * 2              # x tile (bf16, double-buffered)
        + 2 * bm * nin_p * out_bpe      # out tile (double-buffered)
        + 2 * nin_p * nh_p * 2          # W1 + W2 resident (bf16, single-buffered)
        + 8 * (nh_p + nin_p) * 4        # biases (f32, sublane-padded)
        + bm * nh_p * 2                 # h16 intermediate
        + bm * nin_p * 4                # y intermediate (f32)
    )


def _tiled_vmem_bytes(bm, tk, nin_p, out_bpe):
    return (
        2 * bm * nin_p * 2              # x tile (bf16, double-buffered)
        + 2 * bm * nin_p * out_bpe      # out tile (double-buffered)
        + 2 * nin_p * tk * 2            # W1 k-tile (bf16, double-buffered)
        + 2 * tk * nin_p * 2            # W2 k-tile (bf16, double-buffered)
        + 8 * (tk + nin_p) * 4          # biases (f32, sublane-padded)
        + bm * nin_p * 4                # f32 accumulator scratch
        + bm * tk * 2                   # h16 intermediate
        + bm * nin_p * 4                # y intermediate at finalize
    )


def _megacore_bm(B, bm, num_cores):
    """Only split bm for extra grid steps when it actually helps."""
    if num_cores > 1:
        target = 2 * num_cores          # >= 2 steps per core on megacore chips
        if _round_up(B, 8) >= 8 * target and pl.cdiv(B, bm) < target:
            bm = max(8, _round_up(pl.cdiv(B, target), 8))
    elif B >= 192 and pl.cdiv(B, bm) < 3:
        # Single TC: a few grid steps let double-buffering hide batch DMA/writeback.
        bm = max(8, _round_up(pl.cdiv(B, 3), 8))
    return bm


def _select_resident_bm(B, nin_p, nh_p, out_bpe, block_m, budget, num_cores):
    bm = _megacore_bm(B, min(block_m, _round_up(B, 8)), num_cores)
    while bm > 8 and _resident_vmem_bytes(bm, nin_p, nh_p, out_bpe) > budget:
        bm = max(8, _round_up(bm // 2, 8))
    return bm


def _select_tiled_tiles(B, nin_p, nh_p, out_bpe, block_m, budget, num_cores):
    bm = _megacore_bm(B, min(block_m, _round_up(B, 8)), num_cores)
    tk = 512 if nh_p % 512 == 0 else (256 if nh_p % 256 == 0 else 128)
    while _tiled_vmem_bytes(bm, tk, nin_p, out_bpe) > budget:
        if tk > 128 and nh_p % (tk // 2) == 0:
            tk //= 2
        elif bm > 8:
            bm = max(8, _round_up(bm // 2, 8))
        else:
            break
    return bm, tk


# ---------------------------------------------------------------------------
# pallas_call wrappers
# ---------------------------------------------------------------------------

def _call_resident(x_p, w1_p, b1_p, w2_p, b2_p, bm, nin_p, nh_p, out_dtype, vmem_limit):
    b_pad = x_p.shape[0]
    grid_m = b_pad // bm
    return pl.pallas_call(
        _mlp_kernel_resident,
        out_shape=jax.ShapeDtypeStruct((b_pad, nin_p), out_dtype),
        grid_spec=pltpu.PrefetchScalarGridSpec(
            num_scalar_prefetch=0,
            grid=(grid_m,),
            in_specs=[
                pl.BlockSpec((bm, nin_p), lambda i: (i, 0)),                    # x tile
                pl.BlockSpec((nin_p, nh_p), lambda i: (0, 0),
                             pipeline_mode=pl.Buffered(1)),                     # W1 resident
                pl.BlockSpec((1, nh_p), lambda i: (0, 0),
                             pipeline_mode=pl.Buffered(1)),                     # b1
                pl.BlockSpec((nh_p, nin_p), lambda i: (0, 0),
                             pipeline_mode=pl.Buffered(1)),                     # W2 resident
                pl.BlockSpec((1, nin_p), lambda i: (0, 0),
                             pipeline_mode=pl.Buffered(1)),                     # b2
            ],
            out_specs=pl.BlockSpec((bm, nin_p), lambda i: (i, 0)),
        ),
        compiler_params=pltpu.CompilerParams(
            dimension_semantics=("parallel",),
            vmem_limit_bytes=vmem_limit,
        ),
    )(x_p, w1_p, b1_p, w2_p, b2_p)


def _call_tiled(x_p, w1_p, b1_p, w2_p, b2_p, bm, tk, nin_p, nh_p, out_dtype, vmem_limit):
    b_pad = x_p.shape[0]
    grid = (b_pad // bm, nh_p // tk)
    return pl.pallas_call(
        _mlp_kernel_ktiled,
        out_shape=jax.ShapeDtypeStruct((b_pad, nin_p), out_dtype),
        grid_spec=pltpu.PrefetchScalarGridSpec(
            num_scalar_prefetch=0,
            grid=grid,
            in_specs=[
                pl.BlockSpec((bm, nin_p), lambda i, k: (i, 0)),                 # x tile
                pl.BlockSpec((nin_p, tk), lambda i, k: (0, k)),                 # W1 k-tile
                pl.BlockSpec((1, tk), lambda i, k: (0, k)),                     # b1 k-tile
                pl.BlockSpec((tk, nin_p), lambda i, k: (k, 0)),                 # W2 k-tile
                pl.BlockSpec((1, nin_p), lambda i, k: (0, 0),
                             pipeline_mode=pl.Buffered(1)),                     # b2
            ],
            out_specs=pl.BlockSpec((bm, nin_p), lambda i, k: (i, 0)),
            scratch_shapes=[pltpu.VMEM((bm, nin_p), jnp.float32)],
        ),
        compiler_params=pltpu.CompilerParams(
            dimension_semantics=("parallel", "arbitrary"),
            vmem_limit_bytes=vmem_limit,
        ),
    )(x_p, w1_p, b1_p, w2_p, b2_p)


# ---------------------------------------------------------------------------
# Public wrapper
# ---------------------------------------------------------------------------

def _pad2d(a, shape, dtype):
    """Zero-pad `a` up to `shape` and cast; skips the copy when already aligned."""
    if a.shape == shape:
        return a if a.dtype == dtype else a.astype(dtype)
    return jnp.zeros(shape, dtype).at[: a.shape[0], : a.shape[1]].set(a.astype(dtype))


def mlp_normalize(x, w1, b1, w2, b2, *, block_m=512, out_dtype=jnp.float32, path=None):
    """x: (B, nin); w1: (nin, nhidden); b1: (nhidden,); w2: (nhidden, nin); b2: (nin,).

    path: None (auto), "resident" (weights VMEM-resident) or "tiled" (stream hidden dim).
    """
    B, nin = x.shape
    nhidden = w1.shape[1]
    b1 = jnp.asarray(b1).reshape(1, nhidden)
    b2 = jnp.asarray(b2).reshape(1, nin)

    # Lane-dense (multiple-of-128) feature dims. Zero-padded W2 columns / b2 entries keep
    # padded output columns exactly 0, so the per-row L2 norm is unchanged.
    # TODO(synk): on v6e/v7x (2x256^2 MXU) consider rounding odd multiples of 128 up to 256.
    nin_p = _round_up(nin, 128)
    nh_p = _round_up(nhidden, 128)
    out_bpe = jnp.dtype(out_dtype).itemsize

    vmem_cap, num_cores = _tpu_caps()
    budget = max(16 << 20, min(int(vmem_cap * 0.85), vmem_cap - (8 << 20)))

    # Path selection: resident weights only when bf16 W1+W2 leave room for tiles.
    w_bytes = 2 * 2 * nin_p * nh_p
    use_resident = path != "tiled" and (path == "resident" or w_bytes <= int(0.6 * budget))

    tk = None
    if use_resident:
        bm = _select_resident_bm(B, nin_p, nh_p, out_bpe, block_m, budget, num_cores)
        if path is None and _resident_vmem_bytes(bm, nin_p, nh_p, out_bpe) > budget:
            use_resident = False
    if not use_resident:
        bm, tk = _select_tiled_tiles(B, nin_p, nh_p, out_bpe, block_m, budget, num_cores)

    grid_m = pl.cdiv(B, bm)
    b_pad = grid_m * bm

    # NOTE: in production, pad/cast the weights once at parameter init and pass the padded
    # bf16 arrays here (these copies re-read and re-write every weight in HBM per call).
    # The copies below are skipped entirely when shapes/dtypes already match.
    # TODO(synk): optional fp8 weight path for v7x (halves weight DMA / resident VMEM).
    x_p = _pad2d(x, (b_pad, nin_p), jnp.bfloat16)
    w1_p = _pad2d(w1, (nin_p, nh_p), jnp.bfloat16)
    b1_p = _pad2d(b1, (1, nh_p), jnp.float32)
    w2_p = _pad2d(w2, (nh_p, nin_p), jnp.bfloat16)
    b2_p = _pad2d(b2, (1, nin_p), jnp.float32)

    vmem_limit = budget
    if use_resident:
        out = _call_resident(x_p, w1_p, b1_p, w2_p, b2_p, bm, nin_p, nh_p, out_dtype, vmem_limit)
    else:
        out = _call_tiled(x_p, w1_p, b1_p, w2_p, b2_p, bm, tk, nin_p, nh_p, out_dtype, vmem_limit)

    if b_pad != B or nin_p != nin:
        out = out[:B, :nin]
    return out


# ---------------------------------------------------------------------------
# References
# ---------------------------------------------------------------------------

def reference_f32(x, w1, b1, w2, b2):
    h = jnp.maximum(x @ w1 + b1, 0.0)
    y = h @ w2 + b2
    n = jnp.sqrt(jnp.sum(y * y, axis=1, keepdims=True))
    return y / jnp.maximum(n, 1e-12)


def reference_bf16(x, w1, b1, w2, b2):
    # Same bf16-operand / f32-accumulate matmuls as the kernels.
    h = jnp.dot(x.astype(jnp.bfloat16), w1.astype(jnp.bfloat16),
                preferred_element_type=jnp.float32) + b1
    h = jnp.maximum(h, 0.0)
    y = jnp.dot(h.astype(jnp.bfloat16), w2.astype(jnp.bfloat16),
                preferred_element_type=jnp.float32) + b2
    n = jnp.sqrt(jnp.sum(y * y, axis=1, keepdims=True))
    return y / jnp.maximum(n, 1e-12)


if __name__ == "__main__":
    key = jax.random.PRNGKey(0)

    def make_params(k, nin, nhidden):
        kw1, kb1, kw2, kb2 = jax.random.split(k, 4)
        lim1 = 1.0 / (nin ** 0.5)
        lim2 = 1.0 / (nhidden ** 0.5)
        w1 = jax.random.uniform(kw1, (nin, nhidden), jnp.float32, -lim1, lim1)
        b1 = jax.random.uniform(kb1, (1, nhidden), jnp.float32, -lim1, lim1)
        w2 = jax.random.uniform(kw2, (nhidden, nin), jnp.float32, -lim2, lim2)
        b2 = jax.random.uniform(kb2, (1, nin), jnp.float32, -lim2, lim2)
        return w1, b1, w2, b2

    kx1, kp1, kx2, kp2 = jax.random.split(key, 4)

    # Case 1: resident-weights path, f32 output (small shapes).
    B, nin, nhidden = 8, 16, 32
    x = jax.random.normal(kx1, (B, nin), dtype=jnp.float32)
    w1, b1, w2, b2 = make_params(kp1, nin, nhidden)

    out = jax.block_until_ready(mlp_normalize(x, w1, b1, w2, b2))
    assert out.shape == (B, nin)
    assert jnp.allclose(out, reference_f32(x, w1, b1, w2, b2), atol=3e-2, rtol=3e-2), \
        "resident path mismatch vs f32 reference"
    assert jnp.allclose(out, reference_bf16(x, w1, b1, w2, b2), atol=2e-4, rtol=2e-4), \
        "resident path mismatch vs bf16-matched reference"

    # Case 1b: bf16 output path (halves HBM writeback).
    out16 = jax.block_until_ready(mlp_normalize(x, w1, b1, w2, b2, out_dtype=jnp.bfloat16))
    assert out16.dtype == jnp.bfloat16
    assert jnp.allclose(out16.astype(jnp.float32), reference_bf16(x, w1, b1, w2, b2),
                        atol=1e-2, rtol=1e-2), "bf16-output path mismatch"

    # Case 2: force the hidden-dim tiled path (nhidden=300 -> nh_p=384 -> 3 k-tiles of 128).
    B2, nin2, nh2 = 8, 16, 300
    x2 = jax.random.normal(kx2, (B2, nin2), dtype=jnp.float32)
    w1b, b1b, w2b, b2b = make_params(kp2, nin2, nh2)
    out_t = jax.block_until_ready(mlp_normalize(x2, w1b, b1b, w2b, b2b, path="tiled"))
    assert out_t.shape == (B2, nin2)
    assert jnp.allclose(out_t, reference_bf16(x2, w1b, b1b, w2b, b2b), atol=5e-4, rtol=5e-4), \
        "tiled path mismatch vs bf16-matched reference"

    print("KERNEL_OK")
</pallas_src>

<mosaic_0001>
module attributes {stable_mosaic.version = 11 : i64} {
  func.func @_mlp_kernel_resident(%arg0: i32, %arg1: memref<8x128xbf16, #tpu.memory_space<vmem>>, %arg2: memref<128x128xbf16, #tpu.memory_space<vmem>>, %arg3: memref<1x128xf32, #tpu.memory_space<vmem>>, %arg4: memref<128x128xbf16, #tpu.memory_space<vmem>>, %arg5: memref<1x128xf32, #tpu.memory_space<vmem>>, %arg6: memref<8x128xf32, #tpu.memory_space<vmem>>) attributes {dimension_semantics = [#tpu.dimension_semantics<parallel>], iteration_bounds = array<i64: 1>, scalar_prefetch = 0 : i64, scratch_operands = 0 : i64, tpu.core_type = #tpu.core_type<tc>, window_params = [{transform_indices = @transform_0, window_bounds = array<i64: 8, 128>}, {pipeline_mode = #tpu.pipeline_mode<synchronous>, transform_indices = @transform_1, window_bounds = array<i64: 128, 128>}, {pipeline_mode = #tpu.pipeline_mode<synchronous>, transform_indices = @transform_2, window_bounds = array<i64: 1, 128>}, {pipeline_mode = #tpu.pipeline_mode<synchronous>, transform_indices = @transform_3, window_bounds = array<i64: 128, 128>}, {pipeline_mode = #tpu.pipeline_mode<synchronous>, transform_indices = @transform_4, window_bounds = array<i64: 1, 128>}, {transform_indices = @transform_5, window_bounds = array<i64: 8, 128>}]} {
    %c0 = arith.constant 0 : index
    %c0_0 = arith.constant 0 : index
    %0 = vector.load %arg1[%c0, %c0_0] : memref<8x128xbf16, #tpu.memory_space<vmem>>, vector<8x128xbf16>
    %c0_1 = arith.constant 0 : index
    %c0_2 = arith.constant 0 : index
    %1 = vector.load %arg2[%c0_1, %c0_2] : memref<128x128xbf16, #tpu.memory_space<vmem>>, vector<128x128xbf16>
    %cst = arith.constant dense<0.000000e+00> : vector<8x128xf32>
    %2 = tpu.matmul %0, %1, %cst {dimension_numbers = #tpu.dot_dimension_numbers<[1], [0], [0], [1], [0, 0, 1, 1], [], []>} : vector<8x128xbf16>, vector<128x128xbf16>, vector<8x128xf32> -> vector<8x128xf32>
    %c0_3 = arith.constant 0 : index
    %c0_4 = arith.constant 0 : index
    %3 = vector.load %arg3[%c0_3, %c0_4] : memref<1x128xf32, #tpu.memory_space<vmem>>, vector<1x128xf32>
    %4 = vector.broadcast %3 : vector<1x128xf32> to vector<8x128xf32>
    %5 = arith.addf %2, %4 : vector<8x128xf32>
    %cst_5 = arith.constant 0.000000e+00 : f32
    %6 = vector.broadcast %cst_5 : f32 to vector<8x128xf32>
    %7 = arith.maximumf %5, %6 : vector<8x128xf32>
    %8 = arith.truncf %7 : vector<8x128xf32> to vector<8x128xbf16>
    %c0_6 = arith.constant 0 : index
    %c0_7 = arith.constant 0 : index
    %9 = vector.load %arg4[%c0_6, %c0_7] : memref<128x128xbf16, #tpu.memory_space<vmem>>, vector<128x128xbf16>
    %cst_8 = arith.constant dense<0.000000e+00> : vector<8x128xf32>
    %10 = tpu.matmul %8, %9, %cst_8 {dimension_numbers = #tpu.dot_dimension_numbers<[1], [0], [0], [1], [0, 0, 1, 1], [], []>} : vector<8x128xbf16>, vector<128x128xbf16>, vector<8x128xf32> -> vector<8x128xf32>
    %c0_9 = arith.constant 0 : index
    %c0_10 = arith.constant 0 : index
    %11 = vector.load %arg5[%c0_9, %c0_10] : memref<1x128xf32, #tpu.memory_space<vmem>>, vector<1x128xf32>
    %12 = vector.broadcast %11 : vector<1x128xf32> to vector<8x128xf32>
    %13 = arith.addf %10, %12 : vector<8x128xf32>
    %14 = arith.mulf %13, %13 : vector<8x128xf32>
    %cst_11 = arith.constant dense<0.000000e+00> : vector<8xf32>
    %15 = vector.multi_reduction <add>, %14, %cst_11 [1] : vector<8x128xf32> to vector<8xf32>
    %16 = vector.shape_cast %15 : vector<8xf32> to vector<8x1xf32>
    %cst_12 = arith.constant 1.000000e-24 : f32
    %17 = vector.broadcast %cst_12 : f32 to vector<8x1xf32>
    %18 = arith.maximumf %16, %17 : vector<8x1xf32>
    %19 = math.rsqrt %18 : vector<8x1xf32>
    %20 = vector.broadcast %19 : vector<8x1xf32> to vector<8x128xf32>
    %21 = arith.mulf %13, %20 : vector<8x128xf32>
    %c0_13 = arith.constant 0 : index
    %c0_14 = arith.constant 0 : index
    %22 = vector.load %arg6[%c0_13, %c0_14] : memref<8x128xf32, #tpu.memory_space<vmem>>, vector<8x128xf32>
    tpu.vector_store %arg6[%c0_13, %c0_14], %21 {strides = array<i32>} : memref<8x128xf32, #tpu.memory_space<vmem>>, vector<8x128xf32>,
    return
  }
  func.func @transform_0(%arg0: i32) -> (i32, i32) {
    %c0_i32 = arith.constant 0 : i32
    %c0_i32_0 = arith.constant 0 : i32
    return %arg0, %c0_i32 : i32, i32
  }
  func.func @transform_1(%arg0: i32) -> (i32, i32) {
    %c0_i32 = arith.constant 0 : i32
    %c0_i32_0 = arith.constant 0 : i32
    %c0_i32_1 = arith.constant 0 : i32
    return %c0_i32, %c0_i32_0 : i32, i32
  }
  func.func @transform_2(%arg0: i32) -> (i32, i32) {
    %c0_i32 = arith.constant 0 : i32
    %c0_i32_0 = arith.constant 0 : i32
    %c0_i32_1 = arith.constant 0 : i32
    return %c0_i32, %c0_i32_0 : i32, i32
  }
  func.func @transform_3(%arg0: i32) -> (i32, i32) {
    %c0_i32 = arith.constant 0 : i32
    %c0_i32_0 = arith.constant 0 : i32
    %c0_i32_1 = arith.constant 0 : i32
    return %c0_i32, %c0_i32_0 : i32, i32
  }
  func.func @transform_4(%arg0: i32) -> (i32, i32) {
    %c0_i32 = arith.constant 0 : i32
    %c0_i32_0 = arith.constant 0 : i32
    %c0_i32_1 = arith.constant 0 : i32
    return %c0_i32, %c0_i32_0 : i32, i32
  }
  func.func @transform_5(%arg0: i32) -> (i32, i32) {
    %c0_i32 = arith.constant 0 : i32
    %c0_i32_0 = arith.constant 0 : i32
    return %arg0, %c0_i32 : i32, i32
  }
}

</mosaic_0001>

<llo_original>
// kernel: tpu_custom_call.1
$region0: #{tpu_custom_call.1}
  #allocation0 [shape = 'u32[]', space=smem, size = 0x4, offset = 0x4, fixed_abs, tag = 'smem constant byte address 0x4 - core index']
  #allocation1 [shape = 'u32[144,128]{1,0:T(1,128)}', space=vmem, size = 0x12000, scoped, tag = 'internal scratch']
  %s0 = inlined_call_operand.hbm [shape: bf16[8,128], index: 0, kind: input, shape index: {}]
  %s1 = inlined_call_operand.hbm [shape: bf16[128,128], index: 1, kind: input, shape index: {}]
  %s2 = inlined_call_operand.vmem [shape: f32[1,128], index: 2, kind: input, shape index: {}]
  %s3 = inlined_call_operand.hbm [shape: bf16[128,128], index: 3, kind: input, shape index: {}]
  %s4 = inlined_call_operand.vmem [shape: f32[1,128], index: 4, kind: input, shape index: {}]
  %s5 = inlined_call_operand.hbm [shape: f32[8,128], index: 5, kind: output, shape index: {}]
  %s6 = sld [smem:[#allocation0]]
  $region42: #{tpu_custom_call.1} parent=0
    _
  %s8 = ssub.s32 1, %s6
  %s9 = scalar_select 0, %s8, %s6
  $region1: #{tpu_custom_call.1} parent=0
    #allocation2 [shape = 'u8[2048]{0}', space=vmem, size = 0x800, scoped, tag = 'input window, operand 0, single buffered']
    #allocation3 [shape = 's32[1]{0}', space=sflag, size = 0x4, scoped, tag = 'scoped memory for tpu_custom_call.1']
    #allocation4 [shape = 's32[1]{0}', space=sflag, size = 0x4, scoped, tag = 'scoped memory for tpu_custom_call.1']
    #allocation5 [shape = 'u8[32768]{0}', space=vmem, size = 0x8000, scoped, tag = 'input window, operand 1, single buffered']
    #allocation6 [shape = 's32[1]{0}', space=sflag, size = 0x4, scoped, tag = 'scoped memory for tpu_custom_call.1']
    #allocation7 [shape = 'u8[32768]{0}', space=vmem, size = 0x8000, scoped, tag = 'input window, operand 3, single buffered']
    #allocation8 [shape = 'u8[4096]{0}', space=vmem, size = 0x1000, scoped, tag = 'output window, operand 0, single buffered']
    %10 = vsyncpa [#allocation3], 0
    %11 = vsyncpa [#allocation6], 0
    %12 = vsyncpa [#allocation4], 0
    // Predicated region
    $region2: #{tpu_custom_call.1} parent=1 // pred_check
      _
    $region3: #{tpu_custom_call.1} parent=1 // pred_check_branch
      %14 = sbr.rel (0) target = $region5
    $region4: #{tpu_custom_call.1} parent=1 // pred_region
      %s16 = ssub.s32 64, 64
      %17 = vsyncadd [#allocation3], %s16
      %s19 = sshll.u32 [#allocation2], 4
      %s20 = int_to_ptr.vmem [resolvable:$true] %s19
      %22 = dma.hbm_to_vmem [thread:$0]  %s0, 64, %s20, [#allocation3]
    $region5: #{tpu_custom_call.1} parent=1 // pred_fallthru
      _
    // Predicated region
    $region6: #{tpu_custom_call.1} parent=1 // pred_check
      _
    $region7: #{tpu_custom_call.1} parent=1 // pred_check_branch
      %24 = sbr.rel (0) target = $region9
    $region8: #{tpu_custom_call.1} parent=1 // pred_region
      %s26 = ssub.s32 1024, 1024
      %27 = vsyncadd [#allocation6], %s26
      %s28 = sshll.u32 [#allocation5], 4
      %s29 = int_to_ptr.vmem [resolvable:$true] %s28
      %34 = dma.hbm_to_vmem [thread:$0]  %s1, 1024, %s29, [#allocation6], 64, 64, 4
    $region9: #{tpu_custom_call.1} parent=1 // pred_fallthru
      _
    // Predicated region
    $region10: #{tpu_custom_call.1} parent=1 // pred_check
      _
    $region11: #{tpu_custom_call.1} parent=1 // pred_check_branch
      %36 = sbr.rel (0) target = $region13
    $region12: #{tpu_custom_call.1} parent=1 // pred_region
      _
    $region13: #{tpu_custom_call.1} parent=1 // pred_fallthru
      _
    // Predicated region
    $region14: #{tpu_custom_call.1} parent=1 // pred_check
      _
    $region15: #{tpu_custom_call.1} parent=1 // pred_check_branch
      %38 = sbr.rel (0) target = $region17
    $region16: #{tpu_custom_call.1} parent=1 // pred_region
      %s40 = ssub.s32 1024, 1024
      %41 = vsyncadd [#allocation6], %s40
      %s42 = sshll.u32 [#allocation7], 4
      %s43 = int_to_ptr.vmem [resolvable:$true] %s42
      %48 = dma.hbm_to_vmem [thread:$0]  %s3, 1024, %s43, [#allocation6], 64, 64, 4
    $region17: #{tpu_custom_call.1} parent=1 // pred_fallthru
      _
    // Predicated region
    $region18: #{tpu_custom_call.1} parent=1 // pred_check
      _
    $region19: #{tpu_custom_call.1} parent=1 // pred_check_branch
      %50 = sbr.rel (0) target = $region21
    $region20: #{tpu_custom_call.1} parent=1 // pred_region
      _
    $region21: #{tpu_custom_call.1} parent=1 // pred_fallthru
      _
    // Predicated region
    $region22: #{tpu_custom_call.1} parent=1 // pred_check
      _
    $region23: #{tpu_custom_call.1} parent=1 // pred_check_branch
      %52 = sbr.rel (0) target = $region25
    $region24: #{tpu_custom_call.1} parent=1 // pred_region
      %53 = dma.done [#allocation3], 64
    $region25: #{tpu_custom_call.1} parent=1 // pred_fallthru
      _
    // Predicated region
    $region26: #{tpu_custom_call.1} parent=1 // pred_check
      _
    $region27: #{tpu_custom_call.1} parent=1 // pred_check_branch
      %55 = sbr.rel (0) target = $region29
    $region28: #{tpu_custom_call.1} parent=1 // pred_region
      %56 = dma.done [#allocation6], 1024
    $region29: #{tpu_custom_call.1} parent=1 // pred_fallthru
      _
    // Predicated region
    $region30: #{tpu_custom_call.1} parent=1 // pred_check
      _
    $region31: #{tpu_custom_call.1} parent=1 // pred_check_branch
      %58 = sbr.rel (0) target = $region33
    $region32: #{tpu_custom_call.1} parent=1 // pred_region
      %59 = dma.done [#allocation6], 1024
    $region33: #{tpu_custom_call.1} parent=1 // pred_fallthru
      _
    %v61 = vld [vmem:[#allocation2] sm:$0xf]
    %v62 = vld [vmem:[#allocation5] sm:$0xf]
    %v63 = vld [vmem:[#allocation5 + $0x4] sm:$0xf]
    %v64 = vld [vmem:[#allocation5 + $0x8] sm:$0xf]
    %v65 = vld [vmem:[#allocation5 + $0xc] sm:$0xf]
    %v66 = vld [vmem:[#allocation5 + $0x10] sm:$0xf]
    %v67 = vld [vmem:[#allocation5 + $0x14] sm:$0xf]
    %v68 = vld [vmem:[#allocation5 + $0x18] sm:$0xf]
    %v69 = vld [vmem:[#allocation5 + $0x1c] sm:$0xf]
    %v70 = vld [vmem:[#allocation5 + $0x20] sm:$0xf]
    %v71 = vld [vmem:[#allocation5 + $0x24] sm:$0xf]
    %v72 = vld [vmem:[#allocation5 + $0x28] sm:$0xf]
    %v73 = vld [vmem:[#allocation5 + $0x2c] sm:$0xf]
    %v74 = vld [vmem:[#allocation5 + $0x30] sm:$0xf]
    %v75 = vld [vmem:[#allocation5 + $0x34] sm:$0xf]
    %v76 = vld [vmem:[#allocation5 + $0x38] sm:$0xf]
    %v77 = vld [vmem:[#allocation5 + $0x3c] sm:$0xf]
    %v78 = vld [vmem:[%s2] sm:$0x1]
    %v80 = vlaneseq
    %v81 = vshrl.u32 %v80, 7
    %v82 = vsub.s32 0, %v81
    %v83 = vrot.slane %v78, %v82
    %v101 = vunpack.c.l.b16 %v62
    %v102 = vunpack.c.l.b16 %v63
    %v103 = vunpack.c.l.b16 %v64
    %v104 = vunpack.c.l.b16 %v65
    %v105 = vunpack.c.l.b16 %v66
    %v106 = vunpack.c.l.b16 %v67
    %v107 = vunpack.c.l.b16 %v68
    %v108 = vunpack.c.l.b16 %v69
    %v109 = vunpack.c.l.b16 %v70
    %v110 = vunpack.c.l.b16 %v71
    %v111 = vunpack.c.l.b16 %v72
    %v112 = vunpack.c.l.b16 %v73
    %v113 = vunpack.c.l.b16 %v74
    %v114 = vunpack.c.l.b16 %v75
    %v115 = vunpack.c.l.b16 %v76
    %v116 = vunpack.c.l.b16 %v77
    %v117 = vpack.c.b16 %v102, %v101
    %v118 = vpack.c.b16 %v104, %v103
    %v119 = vpack.c.b16 %v106, %v105
    %v120 = vpack.c.b16 %v108, %v107
    %v121 = vpack.c.b16 %v110, %v109
    %v122 = vpack.c.b16 %v112, %v111
    %v123 = vpack.c.b16 %v114, %v113
    %v124 = vpack.c.b16 %v116, %v115
    %133 = vmatprep.subr.bf16.mxu0 0
    %134 = vmatpush1.bf16.msra.mxu0 %v117
    %135 = vmatprep.subr.bf16.mxu0 0
    %136 = vmatpush1.bf16.msra.mxu0 %v118
    %137 = vmatprep.subr.bf16.mxu0 0
    %138 = vmatpush1.bf16.msra.mxu0 %v119
    %139 = vmatprep.subr.bf16.mxu0 0
    %140 = vmatpush1.bf16.msra.mxu0 %v120
    %141 = vmatprep.subr.bf16.mxu0 0
    %142 = vmatpush1.bf16.msra.mxu0 %v121
    %143 = vmatprep.subr.bf16.mxu0 0
    %144 = vmatpush1.bf16.msra.mxu0 %v122
    %145 = vmatprep.subr.bf16.mxu0 0
    %146 = vmatpush1.bf16.msra.mxu0 %v123
    %147 = vmatprep.subr.bf16.mxu0 0
    %148 = vmatpush1.bf16.msra.mxu0 %v124
    %149 = vmatprep.subr.bf16.mxu0 0
    %150 = vmatpush1.bf16.msra.mxu0 0
    %151 = vmatprep.subr.bf16.mxu0 0
    %152 = vmatpush1.bf16.msra.mxu0 0
    %153 = vmatprep.subr.bf16.mxu0 0
    %154 = vmatpush1.bf16.msra.mxu0 0
    %155 = vmatprep.subr.bf16.mxu0 0
    %156 = vmatpush1.bf16.msra.mxu0 0
    %157 = vmatprep.subr.bf16.mxu0 0
    %158 = vmatpush1.bf16.msra.mxu0 0
    %159 = vmatprep.subr.bf16.mxu0 0
    %160 = vmatpush1.bf16.msra.mxu0 0
    %161 = vmatprep.subr.bf16.mxu0 0
    %162 = vmatpush1.bf16.msra.mxu0 0
    %163 = vmatprep.subr.bf16.mxu0 0
    %164 = vmatpush1.bf16.msra.mxu0 0
    %165 = vmatprep.mubr.bf16.mxu0 0
    %166 = vmatmul.mubr.bf16.gmra.mrb[0].mxu0 %v61
    %v167 = vpop.f32.mrb[0].mxu0
    %v168 = vadd.f32 %v83, %v167
    %v169 = vpop.f32.mrb[0].mxu0
    %v170 = vpop.f32.mrb[0].mxu0
    %v171 = vpop.f32.mrb[0].mxu0
    %172 = vdwg.mxu0
    %v173 = vmax.f32 %v168, 0.0
    %v174 = vpack.c.bf16 %v173, %v173
    %v175 = vld [vmem:[#allocation7] sm:$0xf]
    %v176 = vld [vmem:[#allocation7 + $0x4] sm:$0xf]
    %v177 = vld [vmem:[#allocation7 + $0x8] sm:$0xf]
    %v178 = vld [vmem:[#allocation7 + $0xc] sm:$0xf]
    %v179 = vld [vmem:[#allocation7 + $0x10] sm:$0xf]
    %v180 = vld [vmem:[#allocation7 + $0x14] sm:$0xf]
    %v181 = vld [vmem:[#allocation7 + $0x18] sm:$0xf]
    %v182 = vld [vmem:[#allocation7 + $0x1c] sm:$0xf]
    %v183 = vld [vmem:[#allocation7 + $0x20] sm:$0xf]
    %v184 = vld [vmem:[#allocation7 + $0x24] sm:$0xf]
    %v185 = vld [vmem:[#allocation7 + $0x28] sm:$0xf]
    %v186 = vld [vmem:[#allocation7 + $0x2c] sm:$0xf]
    %v187 = vld [vmem:[#allocation7 + $0x30] sm:$0xf]
    %v188 = vld [vmem:[#allocation7 + $0x34] sm:$0xf]
    %v189 = vld [vmem:[#allocation7 + $0x38] sm:$0xf]
    %v190 = vld [vmem:[#allocation7 + $0x3c] sm:$0xf]
    %v191 = vld [vmem:[%s4] sm:$0x1]
    %v193 = vlaneseq
    %v194 = vshrl.u32 %v193, 7
    %v195 = vsub.s32 0, %v194
    %v196 = vrot.slane %v191, %v195
    %v214 = vunpack.c.l.b16 %v175
    %v215 = vunpack.c.l.b16 %v176
    %v216 = vunpack.c.l.b16 %v177
    %v217 = vunpack.c.l.b16 %v178
    %v218 = vunpack.c.l.b16 %v179
    %v219 = vunpack.c.l.b16 %v180
    %v220 = vunpack.c.l.b16 %v181
    %v221 = vunpack.c.l.b16 %v182
    %v222 = vunpack.c.l.b16 %v183
    %v223 = vunpack.c.l.b16 %v184
    %v224 = vunpack.c.l.b16 %v185
    %v225 = vunpack.c.l.b16 %v186
    %v226 = vunpack.c.l.b16 %v187
    %v227 = vunpack.c.l.b16 %v188
    %v228 = vunpack.c.l.b16 %v189
    %v229 = vunpack.c.l.b16 %v190
    %v230 = vpack.c.b16 %v215, %v214
    %v231 = vpack.c.b16 %v217, %v216
    %v232 = vpack.c.b16 %v219, %v218
    %v233 = vpack.c.b16 %v221, %v220
    %v234 = vpack.c.b16 %v223, %v222
    %v235 = vpack.c.b16 %v225, %v224
    %v236 = vpack.c.b16 %v227, %v226
    %v237 = vpack.c.b16 %v229, %v228
    %246 = vmatprep.subr.bf16.mxu0 0
    %247 = vmatpush1.bf16.msra.mxu0 %v230
    %248 = vmatprep.subr.bf16.mxu0 0
    %249 = vmatpush1.bf16.msra.mxu0 %v231
    %250 = vmatprep.subr.bf16.mxu0 0
    %251 = vmatpush1.bf16.msra.mxu0 %v232
    %252 = vmatprep.subr.bf16.mxu0 0
    %253 = vmatpush1.bf16.msra.mxu0 %v233
    %254 = vmatprep.subr.bf16.mxu0 0
    %255 = vmatpush1.bf16.msra.mxu0 %v234
    %256 = vmatprep.subr.bf16.mxu0 0
    %257 = vmatpush1.bf16.msra.mxu0 %v235
    %258 = vmatprep.subr.bf16.mxu0 0
    %259 = vmatpush1.bf16.msra.mxu0 %v236
    %260 = vmatprep.subr.bf16.mxu0 0
    %261 = vmatpush1.bf16.msra.mxu0 %v237
    %262 = vmatprep.subr.bf16.mxu0 0
    %263 = vmatpush1.bf16.msra.mxu0 0
    %264 = vmatprep.subr.bf16.mxu0 0
    %265 = vmatpush1.bf16.msra.mxu0 0
    %266 = vmatprep.subr.bf16.mxu0 0
    %267 = vmatpush1.bf16.msra.mxu0 0
    %268 = vmatprep.subr.bf16.mxu0 0
    %269 = vmatpush1.bf16.msra.mxu0 0
    %270 = vmatprep.subr.bf16.mxu0 0
    %271 = vmatpush1.bf16.msra.mxu0 0
    %272 = vmatprep.subr.bf16.mxu0 0
    %273 = vmatpush1.bf16.msra.mxu0 0
    %274 = vmatprep.subr.bf16.mxu0 0
    %275 = vmatpush1.bf16.msra.mxu0 0
    %276 = vmatprep.subr.bf16.mxu0 0
    %277 = vmatpush1.bf16.msra.mxu0 0
    %278 = vmatprep.mubr.bf16.mxu0 0
    %279 = vmatmul.mubr.bf16.gmra.mrb[0].mxu0 %v174
    %v280 = vpop.f32.mrb[0].mxu0
    %v281 = vadd.f32 %v196, %v280
    %v282 = vpop.f32.mrb[0].mxu0
    %v283 = vpop.f32.mrb[0].mxu0
    %v284 = vpop.f32.mrb[0].mxu0
    %285 = vdwg.mxu0
    %v286 = vmul.f32 %v281, %v281
    %287 = vadd.xlane.f32.xlu0 %v286
    %v288 = vpop.xlane.xlu0 %287
    %v289 = vmax.f32 %v288, 1e-24
    %v290 = vrsqrt.pop %v289
    %v291 = vmul.f32 %v281, %v290
    %292 = vst [vmem:[#allocation8] sm:$0xff] %v291
    // Predicated region
    $region34: #{tpu_custom_call.1} parent=1 // pred_check
      _
    $region35: #{tpu_custom_call.1} parent=1 // pred_check_branch
      %294 = sbr.rel (0) target = $region37
    $region36: #{tpu_custom_call.1} parent=1 // pred_region
      %s296 = ssub.s32 128, 128
      %297 = vsyncadd [#allocation4], %s296
      %s299 = sshll.u32 [#allocation8], 4
      %s300 = int_to_ptr.vmem [resolvable:$true] %s299
      %302 = dma.vmem_to_hbm [thread:$0]  %s300, 128, %s5, [#allocation4]
    $region37: #{tpu_custom_call.1} parent=1 // pred_fallthru
      _
    // Predicated region
    $region38: #{tpu_custom_call.1} parent=1 // pred_check
      _
    $region39: #{tpu_custom_call.1} parent=1 // pred_check_branch
      %304 = sbr.rel (0) target = $region41
    $region40: #{tpu_custom_call.1} parent=1 // pred_region
      %305 = dma.done [#allocation4], 128
    $region41: #{tpu_custom_call.1} parent=1 // pred_fallthru
      _
    %306 = vsyncpa [#allocation3], 1
    %307 = vsyncpa [#allocation6], 1
    %308 = vsyncpa [#allocation4], 1

</llo_original>
